<compile_context>
chip_gen: v7x
topology: tpu7x:2x2x1
jax: 0.10.0
libtpu: 0.0.40
codegen_flags: <defaults>
</compile_context>

<pallas_src>
import jax
import jax.numpy as jnp
from jax.experimental import pallas as pl
from jax.experimental.pallas import tpu as pltpu


def _fused_linear_kernel(b_ref, x1_ref, x2_ref, w1_ref, w2_ref, o_ref):
    # b_ref : (1, 1)     SMEM scalar = b1 + b2
    # x1_ref: (in1, TB)  features on sublanes, batch on lanes (lane-dense)
    # x2_ref: (in2, TB)
    # w1_ref: (in1, 1)   dense1 weight column, broadcast across lanes
    # w2_ref: (in2, 1)   dense2 weight column
    # o_ref : (1, TB)    lane-dense output row
    # VPU multiply + XLU sublane reduction; deliberately NOT an MXU matmul (K=20, N=1).
    acc = jnp.sum(x1_ref[...] * w1_ref[...], axis=0, keepdims=True)
    acc = acc + jnp.sum(x2_ref[...] * w2_ref[...], axis=0, keepdims=True)
    o_ref[...] = acc + b_ref[0, 0]


def _round_up(n, m):
    return ((n + m - 1) // m) * m


def multiple_input_net(x1, x2, w1, b1, w2, b2, *, block_b=32768, min_pallas_batch=0):
    """Equivalent of MultipleInputNet.forward(x1, x2) = dense1(x1) + dense2(x2)."""
    B, in1 = x1.shape
    _, in2 = x2.shape
    out_f = w1.shape[0]
    assert w1.shape == (out_f, in1) and w2.shape == (out_f, in2)
    # The fused weight-column layout silently assumes a single output feature.
    assert out_f == 1, "kernel layout assumes out_features == 1"
    assert b1.shape == (out_f,) and b2.shape == (out_f,)

    if B < min_pallas_batch:
        # Tiny batches: pallas_call is pure launch overhead; let XLA fuse the GEMV.
        return (x1 @ w1.T + b1) + (x2 @ w2.T + b2)

    # Batch on the lane axis; two separate transposed inputs (no concat, no pad).
    x1t = x1.astype(jnp.float32).T                                   # (in1, B)
    x2t = x2.astype(jnp.float32).T                                   # (in2, B)
    w1c = w1.astype(jnp.float32).T                                   # (in1, 1)
    w2c = w2.astype(jnp.float32).T                                   # (in2, 1)
    b = (b1.reshape(()) + b2.reshape(())).reshape(1, 1).astype(jnp.float32)

    # Lane-axis tiling: multiples of 128, >= 2 tiles when possible (v7x dual-TC),
    # capped by block_b to stay well inside every generation's scoped VMEM.
    if B <= 128:
        tile_b = B                                    # single full-array block
    else:
        tile_b = min(block_b, max(128, _round_up(pl.cdiv(B, 2), 128)))

    num_tiles = pl.cdiv(B, tile_b)
    bp = num_tiles * tile_b          # output lane dim rounded up -> all stores unmasked
    grid = (num_tiles,)

    out = pl.pallas_call(
        _fused_linear_kernel,
        out_shape=jax.ShapeDtypeStruct((1, bp), jnp.float32),
        grid=grid,
        in_specs=[
            pl.BlockSpec(memory_space=pltpu.MemorySpace.SMEM),   # fused bias scalar (no VMEM tile)
            pl.BlockSpec((in1, tile_b), lambda i: (0, i)),       # x1 tile, lane = batch
            pl.BlockSpec((in2, tile_b), lambda i: (0, i)),       # x2 tile, lane = batch
            pl.BlockSpec((in1, 1), lambda i: (0, 0)),            # dense1 weight column
            pl.BlockSpec((in2, 1), lambda i: (0, 0)),            # dense2 weight column
        ],
        out_specs=pl.BlockSpec((1, tile_b), lambda i: (0, i)),   # lane-dense output row
        compiler_params=pltpu.CompilerParams(
            dimension_semantics=("parallel",),                   # shard batch tiles across TCs (v7x)
            vmem_limit_bytes=32 * 1024 * 1024,                   # covers v5e's 16 MiB default
        ),
    )(b, x1t, x2t, w1c, w2c)

    # Back to PyTorch (B, 1); any garbage lanes from a ragged last tile are dropped here.
    return out[0, :B].reshape(B, 1)


if __name__ == "__main__":
    key = jax.random.PRNGKey(0)
    k_x1, k_x2, k_w1, k_b1, k_w2, k_b2, k_big1, k_big2 = jax.random.split(key, 8)

    B, IN, OUT = 8, 10, 1

    # Inputs (small shapes matching the PyTorch module: Linear(10, 1) x 2).
    x1 = jax.random.normal(k_x1, (B, IN), dtype=jnp.float32)
    x2 = jax.random.normal(k_x2, (B, IN), dtype=jnp.float32)

    # torch.nn.Linear-style init: uniform in [-1/sqrt(in_features), 1/sqrt(in_features)].
    bound = 1.0 / (IN ** 0.5)
    w1 = jax.random.uniform(k_w1, (OUT, IN), minval=-bound, maxval=bound, dtype=jnp.float32)
    b1 = jax.random.uniform(k_b1, (OUT,), minval=-bound, maxval=bound, dtype=jnp.float32)
    w2 = jax.random.uniform(k_w2, (OUT, IN), minval=-bound, maxval=bound, dtype=jnp.float32)
    b2 = jax.random.uniform(k_b2, (OUT,), minval=-bound, maxval=bound, dtype=jnp.float32)

    # ---- small-batch path (single full-array block) ----
    out = jax.block_until_ready(multiple_input_net(x1, x2, w1, b1, w2, b2))
    ref = x1 @ w1.T + b1 + x2 @ w2.T + b2
    assert out.shape == (B, OUT)
    assert jnp.allclose(out, ref, atol=1e-5, rtol=1e-5)

    # ---- larger-batch path (2 lane tiles of 256, ragged last tile, no pad) ----
    BB = 300
    xb1 = jax.random.normal(k_big1, (BB, IN), dtype=jnp.float32)
    xb2 = jax.random.normal(k_big2, (BB, IN), dtype=jnp.float32)
    out_big = jax.block_until_ready(multiple_input_net(xb1, xb2, w1, b1, w2, b2))
    ref_big = xb1 @ w1.T + b1 + xb2 @ w2.T + b2
    assert out_big.shape == (BB, OUT)
    assert jnp.allclose(out_big, ref_big, atol=1e-5, rtol=1e-5)

    print("KERNEL_OK")
</pallas_src>

<mosaic_0001>
module attributes {stable_mosaic.version = 11 : i64} {
  func.func @_fused_linear_kernel(%arg0: i32, %arg1: memref<1x1xf32, #tpu.memory_space<smem>>, %arg2: memref<10x8xf32, #tpu.memory_space<vmem>>, %arg3: memref<10x8xf32, #tpu.memory_space<vmem>>, %arg4: memref<10x1xf32, #tpu.memory_space<vmem>>, %arg5: memref<10x1xf32, #tpu.memory_space<vmem>>, %arg6: memref<1x8xf32, #tpu.memory_space<vmem>>) attributes {dimension_semantics = [#tpu.dimension_semantics<parallel>], iteration_bounds = array<i64: 1>, scalar_prefetch = 0 : i64, scratch_operands = 0 : i64, tpu.core_type = #tpu.core_type<tc>, window_params = [{transform_indices = @transform_0, window_bounds = array<i64: 1, 1>}, {transform_indices = @transform_1, window_bounds = array<i64: 10, 8>}, {transform_indices = @transform_2, window_bounds = array<i64: 10, 8>}, {pipeline_mode = #tpu.pipeline_mode<synchronous>, transform_indices = @transform_3, window_bounds = array<i64: 10, 1>}, {pipeline_mode = #tpu.pipeline_mode<synchronous>, transform_indices = @transform_4, window_bounds = array<i64: 10, 1>}, {transform_indices = @transform_5, window_bounds = array<i64: 1, 8>}]} {
    %c0 = arith.constant 0 : index
    %c0_0 = arith.constant 0 : index
    %0 = vector.load %arg2[%c0, %c0_0] : memref<10x8xf32, #tpu.memory_space<vmem>>, vector<10x8xf32>
    %c0_1 = arith.constant 0 : index
    %c0_2 = arith.constant 0 : index
    %1 = vector.load %arg4[%c0_1, %c0_2] : memref<10x1xf32, #tpu.memory_space<vmem>>, vector<10x1xf32>
    %2 = vector.broadcast %1 : vector<10x1xf32> to vector<10x8xf32>
    %3 = arith.mulf %0, %2 : vector<10x8xf32>
    %cst = arith.constant dense<0.000000e+00> : vector<8xf32>
    %4 = vector.multi_reduction <add>, %3, %cst [0] : vector<10x8xf32> to vector<8xf32>
    %5 = vector.shape_cast %4 : vector<8xf32> to vector<1x8xf32>
    %c0_3 = arith.constant 0 : index
    %c0_4 = arith.constant 0 : index
    %6 = vector.load %arg3[%c0_3, %c0_4] : memref<10x8xf32, #tpu.memory_space<vmem>>, vector<10x8xf32>
    %c0_5 = arith.constant 0 : index
    %c0_6 = arith.constant 0 : index
    %7 = vector.load %arg5[%c0_5, %c0_6] : memref<10x1xf32, #tpu.memory_space<vmem>>, vector<10x1xf32>
    %8 = vector.broadcast %7 : vector<10x1xf32> to vector<10x8xf32>
    %9 = arith.mulf %6, %8 : vector<10x8xf32>
    %cst_7 = arith.constant dense<0.000000e+00> : vector<8xf32>
    %10 = vector.multi_reduction <add>, %9, %cst_7 [0] : vector<10x8xf32> to vector<8xf32>
    %11 = vector.shape_cast %10 : vector<8xf32> to vector<1x8xf32>
    %12 = arith.addf %5, %11 : vector<1x8xf32>
    %c0_8 = arith.constant 0 : index
    %c0_9 = arith.constant 0 : index
    %13 = memref.load %arg1[%c0_8, %c0_9] : memref<1x1xf32, #tpu.memory_space<smem>>
    %14 = vector.broadcast %13 : f32 to vector<1x8xf32>
    %15 = arith.addf %12, %14 : vector<1x8xf32>
    %c0_10 = arith.constant 0 : index
    %c0_11 = arith.constant 0 : index
    %16 = vector.load %arg6[%c0_10, %c0_11] : memref<1x8xf32, #tpu.memory_space<vmem>>, vector<1x8xf32>
    tpu.vector_store %arg6[%c0_10, %c0_11], %15 {strides = array<i32>} : memref<1x8xf32, #tpu.memory_space<vmem>>, vector<1x8xf32>,
    return
  }
  func.func @transform_0(%arg0: i32) -> (i32, i32) {
    %c0_i32 = arith.constant 0 : i32
    %c0_i32_0 = arith.constant 0 : i32
    %c0_i32_1 = arith.constant 0 : i32
    return %c0_i32, %c0_i32_0 : i32, i32
  }
  func.func @transform_1(%arg0: i32) -> (i32, i32) {
    %c0_i32 = arith.constant 0 : i32
    %c0_i32_0 = arith.constant 0 : i32
    return %c0_i32, %arg0 : i32, i32
  }
  func.func @transform_2(%arg0: i32) -> (i32, i32) {
    %c0_i32 = arith.constant 0 : i32
    %c0_i32_0 = arith.constant 0 : i32
    return %c0_i32, %arg0 : i32, i32
  }
  func.func @transform_3(%arg0: i32) -> (i32, i32) {
    %c0_i32 = arith.constant 0 : i32
    %c0_i32_0 = arith.constant 0 : i32
    %c0_i32_1 = arith.constant 0 : i32
    return %c0_i32, %c0_i32_0 : i32, i32
  }
  func.func @transform_4(%arg0: i32) -> (i32, i32) {
    %c0_i32 = arith.constant 0 : i32
    %c0_i32_0 = arith.constant 0 : i32
    %c0_i32_1 = arith.constant 0 : i32
    return %c0_i32, %c0_i32_0 : i32, i32
  }
  func.func @transform_5(%arg0: i32) -> (i32, i32) {
    %c0_i32 = arith.constant 0 : i32
    %c0_i32_0 = arith.constant 0 : i32
    return %c0_i32, %arg0 : i32, i32
  }
}

</mosaic_0001>

<llo_original>
// kernel: tpu_custom_call.1
$region0: #{tpu_custom_call.1}
  #allocation0 [shape = 'u32[]', space=smem, size = 0x4, offset = 0x4, fixed_abs, tag = 'smem constant byte address 0x4 - core index']
  #allocation1 [shape = 'u32[144,128]{1,0:T(1,128)}', space=vmem, size = 0x12000, scoped, tag = 'internal scratch']
  #allocation2 [shape = 'f32[1,1]{1,0:T(1,128)S(6)}', space=smem, size = 0x200, scoped, tag = 'scoped memory for tpu_custom_call.1']
  %s0 = inlined_call_operand.<no memory space> [shape: f32[1,1], index: 0, kind: input, shape index: {}]
  %s1 = inlined_call_operand.vmem [shape: f32[10,8], index: 1, kind: input, shape index: {}]
  %s2 = inlined_call_operand.vmem [shape: f32[10,8], index: 2, kind: input, shape index: {}]
  %s3 = inlined_call_operand.vmem [shape: f32[10,1], index: 3, kind: input, shape index: {}]
  %s4 = inlined_call_operand.vmem [shape: f32[10,1], index: 4, kind: input, shape index: {}]
  %s5 = inlined_call_operand.hbm [shape: f32[1,8], index: 5, kind: output, shape index: {}]
  %s6 = sld [smem:[#allocation0]]
  $region30: #{tpu_custom_call.1} parent=0
    _
  %s8 = ssub.s32 1, %s6
  %s9 = scalar_select 0, %s8, %s6
  %10 = sst [smem:[#allocation2]] %s0
  $region1: #{tpu_custom_call.1} parent=0
    #allocation3 [shape = 'u8[512]{0}', space=vmem, size = 0x400, scoped, tag = 'output window, operand 0, single buffered']
    #allocation4 [shape = 's32[1]{0}', space=sflag, size = 0x4, scoped, tag = 'scoped memory for tpu_custom_call.1']
    %11 = vsyncpa [#allocation4], 0
    // Predicated region
    $region2: #{tpu_custom_call.1} parent=1 // pred_check
      _
    $region3: #{tpu_custom_call.1} parent=1 // pred_check_branch
      %13 = sbr.rel (0) target = $region5
    $region4: #{tpu_custom_call.1} parent=1 // pred_region
      _
    $region5: #{tpu_custom_call.1} parent=1 // pred_fallthru
      _
    // Predicated region
    $region6: #{tpu_custom_call.1} parent=1 // pred_check
      _
    $region7: #{tpu_custom_call.1} parent=1 // pred_check_branch
      %15 = sbr.rel (0) target = $region9
    $region8: #{tpu_custom_call.1} parent=1 // pred_region
      _
    $region9: #{tpu_custom_call.1} parent=1 // pred_fallthru
      _
    // Predicated region
    $region10: #{tpu_custom_call.1} parent=1 // pred_check
      _
    $region11: #{tpu_custom_call.1} parent=1 // pred_check_branch
      %17 = sbr.rel (0) target = $region13
    $region12: #{tpu_custom_call.1} parent=1 // pred_region
      _
    $region13: #{tpu_custom_call.1} parent=1 // pred_fallthru
      _
    // Predicated region
    $region14: #{tpu_custom_call.1} parent=1 // pred_check
      _
    $region15: #{tpu_custom_call.1} parent=1 // pred_check_branch
      %19 = sbr.rel (0) target = $region17
    $region16: #{tpu_custom_call.1} parent=1 // pred_region
      _
    $region17: #{tpu_custom_call.1} parent=1 // pred_fallthru
      _
    // Predicated region
    $region18: #{tpu_custom_call.1} parent=1 // pred_check
      _
    $region19: #{tpu_custom_call.1} parent=1 // pred_check_branch
      %21 = sbr.rel (0) target = $region21
    $region20: #{tpu_custom_call.1} parent=1 // pred_region
      _
    $region21: #{tpu_custom_call.1} parent=1 // pred_fallthru
      _
    %v22 = vld [vmem:[%s1] sm:$0xff]
    %v23 = vld [vmem:[%s1 + $0x8] sm:$0x3]
    %v24 = vld [vmem:[%s3] sm:$0xff]
    %v25 = vld [vmem:[%s3 + $0x8] sm:$0x3]
    %27 = vset.pattern.permute.xlu0 0
    %28 = vperm.xlu0 %27, %v24
    %v29 = vpop.permute.xlu0 %28
    %32 = vset.pattern.permute.xlu0 0
    %33 = vperm.xlu0 %32, %v25
    %v34 = vpop.permute.xlu0 %33
    %v36 = vmul.f32 %v22, %v29
    %v37 = vmul.f32 %v23, %v34
    %vm38 = vcmask 64512
    %v39 = vsel %vm38, %v36, 0.0
    %vm40 = vcmask 58368
    %v41 = vsel %vm40, %v37, 0.0
    %v42 = vadd.f32 %v39, %v41
    %v43 = vrot.slane %v42, 4
    %v44 = vadd.f32 %v42, %v43
    %v45 = vrot.slane %v44, 2
    %v46 = vadd.f32 %v44, %v45
    %v47 = vrot.slane %v46, 1
    %v48 = vadd.f32 %v46, %v47
    %v49 = vld [vmem:[%s2] sm:$0xff]
    %v50 = vld [vmem:[%s2 + $0x8] sm:$0x3]
    %v51 = vld [vmem:[%s4] sm:$0xff]
    %v52 = vld [vmem:[%s4 + $0x8] sm:$0x3]
    %54 = vset.pattern.permute.xlu0 0
    %55 = vperm.xlu0 %54, %v51
    %v56 = vpop.permute.xlu0 %55
    %59 = vset.pattern.permute.xlu0 0
    %60 = vperm.xlu0 %59, %v52
    %v61 = vpop.permute.xlu0 %60
    %v63 = vmul.f32 %v49, %v56
    %v64 = vmul.f32 %v50, %v61
    %v65 = vsel %vm38, %v63, 0.0
    %v66 = vsel %vm40, %v64, 0.0
    %v67 = vadd.f32 %v65, %v66
    %v68 = vrot.slane %v67, 4
    %v69 = vadd.f32 %v67, %v68
    %v70 = vrot.slane %v69, 2
    %v71 = vadd.f32 %v69, %v70
    %v72 = vrot.slane %v71, 1
    %v73 = vadd.f32 %v71, %v72
    %v74 = vadd.f32 %v48, %v73
    %s75 = sld [smem:[#allocation2]]
    %v76 = vstv %s75
    %v77 = vadd.f32 %v74, %v76
    %vm78 = vcmask 57344
    %79 = vst.msk [vmem:[#allocation3] sm:$0x1] %vm78, %v77
    // Predicated region
    $region22: #{tpu_custom_call.1} parent=1 // pred_check
      _
    $region23: #{tpu_custom_call.1} parent=1 // pred_check_branch
      %81 = sbr.rel (0) target = $region25
    $region24: #{tpu_custom_call.1} parent=1 // pred_region
      %s83 = ssub.s32 16, 16
      %84 = vsyncadd [#allocation4], %s83
      %s86 = sshll.u32 [#allocation3], 4
      %s87 = int_to_ptr.vmem [resolvable:$true] %s86
      %89 = dma.vmem_to_hbm [thread:$0]  %s87, 16, %s5, [#allocation4]
    $region25: #{tpu_custom_call.1} parent=1 // pred_fallthru
      _
    // Predicated region
    $region26: #{tpu_custom_call.1} parent=1 // pred_check
      _
    $region27: #{tpu_custom_call.1} parent=1 // pred_check_branch
      %91 = sbr.rel (0) target = $region29
    $region28: #{tpu_custom_call.1} parent=1 // pred_region
      %92 = dma.done [#allocation4], 16
    $region29: #{tpu_custom_call.1} parent=1 // pred_fallthru
      _
    %93 = vsyncpa [#allocation4], 1

</llo_original>
